<compile_context>
chip_gen: v5e
topology: v5e:2x2
jax: 0.10.0
libtpu: 0.0.40
codegen_flags: <defaults>
</compile_context>

<pallas_src>
import functools

import jax
import jax.numpy as jnp
from jax.experimental import pallas as pl
from jax.experimental.pallas import tpu as pltpu

# lhs (1, D), rhs (tm, D), contract the LAST dim of both -> result (1, tm):
# the row index of x lands directly on the 128-lane axis of the output.
_NT_DIM_NUMBERS = (((1,), (1,)), ((), ()))


def _bernoulli_gate_kernel(x_ref, w_ref, b_ref, logits_ref, probs_ref):
    # x_ref:      (tm, D)  tile of flattened word representations (input dtype)
    # w_ref:      (1, D)   Linear weight row (Mosaic pads the MXU M dim)
    # b_ref:      (1,)     Linear bias scalar, in SMEM
    # logits_ref: (1, tm)  lane-dense logits row
    # probs_ref:  (1, tm)  lane-dense probs row
    s = jax.lax.dot_general(
        w_ref[...], x_ref[...],
        dimension_numbers=_NT_DIM_NUMBERS,
        preferred_element_type=jnp.float32,
    )                                           # (1, tm), f32 accumulation
    logits = s + b_ref[0]
    logits_ref[...] = logits.astype(logits_ref.dtype)
    probs_ref[...] = jax.nn.sigmoid(logits).astype(probs_ref.dtype)


def _round_up(a, b):
    return (a + b - 1) // b * b


@functools.lru_cache(maxsize=1)
def _vmem_capacity_bytes():
    try:
        return int(pltpu.get_tpu_info().vmem_capacity_bytes)
    except Exception:
        return 64 << 20  # conservative fallback: v7x physical VMEM per TC


@functools.partial(jax.jit, static_argnames=("tm",))
def bernoulli_gate(x, weight, bias, *, tm=None):
    """
    x:      [B, T, D]   activations (f32 or bf16; bf16 halves HBM traffic)
    weight: [1, D]      torch.nn.Linear weight layout
    bias:   [1]         torch.nn.Linear bias
    returns (logits [B, T, 1], probs [B, T, 1]) -- Bernoulli parameters.

    Note: the weight is cast to x.dtype before the MXU dot (accumulation stays
    f32), a tiny deviation from PyTorch's f32-weight Linear for bf16 inputs.
    """
    B, T, D = x.shape
    N = B * T
    itemsize = jnp.dtype(x.dtype).itemsize
    row_bytes = D * itemsize

    vmem_cap = _vmem_capacity_bytes()
    # Per-tile x budget: <= 5/16 of physical VMEM (double buffer stays under
    # ~40% of VMEM), capped at 32 MiB.  v5e/v6e -> 32 MiB tiles, v7x -> 20 MiB.
    per_tile_budget = min(32 << 20, (vmem_cap * 5) // 16)
    tm_budget = max(128, (per_tile_budget // row_bytes) // 128 * 128)

    if tm is None:
        # Keep >= ~4 grid steps for large N: both v7x TensorCores get work and
        # the DMA pipeline has iterations to overlap.
        tm_grid = max(128, _round_up(pl.cdiv(N, 4), 128))
        tm_eff = min(tm_budget, tm_grid)
    else:
        tm_eff = min(max(128, (int(tm) // 128) * 128), tm_budget,
                     max(128, _round_up(N, 128)))

    grid = (pl.cdiv(N, tm_eff),)     # ragged final block handled by Pallas

    x2 = x.reshape(N, D)                                  # no padding copy
    w1 = weight.reshape(1, D).astype(x.dtype)             # (1, D), resident
    b1 = bias.reshape(1).astype(jnp.float32)              # (1,) -> SMEM

    x_tile_bytes = tm_eff * row_bytes
    vmem_limit = int(max(32 << 20,
                         min(2 * x_tile_bytes + (16 << 20),
                             (vmem_cap * 7) // 8)))

    cost = pl.CostEstimate(
        flops=2 * N * D,
        transcendentals=N,
        bytes_accessed=N * D * itemsize + 2 * N * itemsize + D * itemsize,
    )

    logits_row, probs_row = pl.pallas_call(
        _bernoulli_gate_kernel,
        out_shape=(
            jax.ShapeDtypeStruct((1, N), x.dtype),
            jax.ShapeDtypeStruct((1, N), x.dtype),
        ),
        grid_spec=pltpu.PrefetchScalarGridSpec(
            num_scalar_prefetch=0,
            grid=grid,
            in_specs=[
                pl.BlockSpec((tm_eff, D), lambda i: (i, 0)),          # x rows
                pl.BlockSpec((1, D), lambda i: (0, 0)),               # weight
                pl.BlockSpec((1,), lambda i: (0,),
                             memory_space=pltpu.MemorySpace.SMEM),    # bias
            ],
            out_specs=[
                pl.BlockSpec((1, tm_eff), lambda i: (0, i)),
                pl.BlockSpec((1, tm_eff), lambda i: (0, i)),
            ],
        ),
        compiler_params=pltpu.CompilerParams(
            dimension_semantics=("parallel",),
            vmem_limit_bytes=vmem_limit,
        ),
        cost_estimate=cost,
    )(x2, w1, b1)

    logits = logits_row.reshape(B, T, 1)
    probs = probs_row.reshape(B, T, 1)
    return logits, probs


if __name__ == "__main__":
    # Small [B, T, D] word representations; N=200 exercises the ragged
    # final-block path (no host-side padding).
    B, T, D = 2, 100, 128

    key = jax.random.PRNGKey(0)
    kx, kw, kb = jax.random.split(key, 3)

    # Deterministic "Linear(in_features=D, out_features=1)" parameters
    # (synthetic init; same shapes/layout as torch.nn.Linear).
    bound = 1.0 / jnp.sqrt(D)
    weight = jax.random.uniform(kw, (1, D), jnp.float32, -bound, bound)
    bias = jax.random.uniform(kb, (1,), jnp.float32, -bound, bound)

    x = jax.random.normal(kx, (B, T, D), jnp.float32)

    logits, probs = bernoulli_gate(x, weight, bias)
    jax.block_until_ready((logits, probs))

    # Reference check in plain JAX (f32, ragged N path).
    ref_logits = x @ weight.T + bias  # [B, T, 1]
    ref_probs = jax.nn.sigmoid(ref_logits)
    assert logits.shape == (B, T, 1) and probs.shape == (B, T, 1)
    assert jnp.allclose(logits, ref_logits, atol=1e-4, rtol=1e-4)
    assert jnp.allclose(probs, ref_probs, atol=1e-5, rtol=1e-4)

    # Tile-aligned shape, bf16 activations streamed in their own dtype.
    xb = jax.random.normal(jax.random.PRNGKey(1), (4, 128, D), jnp.bfloat16)
    lb, pb = bernoulli_gate(xb, weight, bias)
    jax.block_until_ready((lb, pb))
    rb = xb.astype(jnp.float32) @ weight.T + bias
    assert jnp.allclose(lb.astype(jnp.float32), rb, atol=3e-2, rtol=3e-2)
    assert jnp.allclose(pb.astype(jnp.float32), jax.nn.sigmoid(rb),
                        atol=1e-2, rtol=1e-2)

    # TODO(synk): the torch.distributions.Bernoulli object itself (sample /
    # log_prob methods) is host-side API, not a kernel op; the kernel returns
    # its parameters (logits, probs).
    print("KERNEL_OK")
</pallas_src>

<mosaic_0001>
module attributes {stable_mosaic.version = 11 : i64} {
  func.func @_bernoulli_gate_kernel(%arg0: i32, %arg1: memref<128x128xf32, #tpu.memory_space<vmem>>, %arg2: memref<1x128xf32, #tpu.memory_space<vmem>>, %arg3: memref<1xf32, #tpu.memory_space<smem>>, %arg4: memref<1x128xf32, #tpu.memory_space<vmem>>, %arg5: memref<1x128xf32, #tpu.memory_space<vmem>>) attributes {dimension_semantics = [#tpu.dimension_semantics<parallel>], iteration_bounds = array<i64: 2>, scalar_prefetch = 0 : i64, scratch_operands = 0 : i64, tpu.core_type = #tpu.core_type<tc>, window_params = [{transform_indices = @transform_0, window_bounds = array<i64: 128, 128>}, {pipeline_mode = #tpu.pipeline_mode<synchronous>, transform_indices = @transform_1, window_bounds = array<i64: 1, 128>}, {transform_indices = @transform_2, window_bounds = array<i64: 1>}, {transform_indices = @transform_3, window_bounds = array<i64: 1, 128>}, {transform_indices = @transform_4, window_bounds = array<i64: 1, 128>}]} {
    %c0 = arith.constant 0 : index
    %c0_0 = arith.constant 0 : index
    %0 = vector.load %arg2[%c0, %c0_0] : memref<1x128xf32, #tpu.memory_space<vmem>>, vector<1x128xf32>
    %c0_1 = arith.constant 0 : index
    %c0_2 = arith.constant 0 : index
    %1 = vector.load %arg1[%c0_1, %c0_2] : memref<128x128xf32, #tpu.memory_space<vmem>>, vector<128x128xf32>
    %cst = arith.constant dense<0.000000e+00> : vector<1x128xf32>
    %2 = tpu.matmul %0, %1, %cst {dimension_numbers = #tpu.dot_dimension_numbers<[1], [1], [0], [0], [0, 0, 1, 0], [], []>} : vector<1x128xf32>, vector<128x128xf32>, vector<1x128xf32> -> vector<1x128xf32>
    %c0_3 = arith.constant 0 : index
    %3 = memref.load %arg3[%c0_3] : memref<1xf32, #tpu.memory_space<smem>>
    %4 = vector.broadcast %3 : f32 to vector<1x128xf32>
    %5 = arith.addf %2, %4 : vector<1x128xf32>
    %c0_4 = arith.constant 0 : index
    %c0_5 = arith.constant 0 : index
    %6 = vector.load %arg4[%c0_4, %c0_5] : memref<1x128xf32, #tpu.memory_space<vmem>>, vector<1x128xf32>
    tpu.vector_store %arg4[%c0_4, %c0_5], %5 {strides = array<i32>} : memref<1x128xf32, #tpu.memory_space<vmem>>, vector<1x128xf32>,
    %7 = arith.negf %5 : vector<1x128xf32>
    %8 = math.exp %7 : vector<1x128xf32>
    %cst_6 = arith.constant 1.000000e+00 : f32
    %9 = vector.broadcast %cst_6 : f32 to vector<1x128xf32>
    %10 = arith.addf %9, %8 : vector<1x128xf32>
    %11 = arith.divf %9, %10 : vector<1x128xf32>
    %c0_7 = arith.constant 0 : index
    %c0_8 = arith.constant 0 : index
    %12 = vector.load %arg5[%c0_7, %c0_8] : memref<1x128xf32, #tpu.memory_space<vmem>>, vector<1x128xf32>
    tpu.vector_store %arg5[%c0_7, %c0_8], %11 {strides = array<i32>} : memref<1x128xf32, #tpu.memory_space<vmem>>, vector<1x128xf32>,
    return
  }
  func.func @transform_0(%arg0: i32) -> (i32, i32) {
    %c0_i32 = arith.constant 0 : i32
    %c0_i32_0 = arith.constant 0 : i32
    return %arg0, %c0_i32 : i32, i32
  }
  func.func @transform_1(%arg0: i32) -> (i32, i32) {
    %c0_i32 = arith.constant 0 : i32
    %c0_i32_0 = arith.constant 0 : i32
    %c0_i32_1 = arith.constant 0 : i32
    return %c0_i32, %c0_i32_0 : i32, i32
  }
  func.func @transform_2(%arg0: i32) -> i32 {
    %c0_i32 = arith.constant 0 : i32
    %c0_i32_0 = arith.constant 0 : i32
    return %c0_i32 : i32
  }
  func.func @transform_3(%arg0: i32) -> (i32, i32) {
    %c0_i32 = arith.constant 0 : i32
    %c0_i32_0 = arith.constant 0 : i32
    return %c0_i32, %arg0 : i32, i32
  }
  func.func @transform_4(%arg0: i32) -> (i32, i32) {
    %c0_i32 = arith.constant 0 : i32
    %c0_i32_0 = arith.constant 0 : i32
    return %c0_i32, %arg0 : i32, i32
  }
}

</mosaic_0001>

<llo_original>
// kernel: bernoulli_gate.1
$region0: #{bernoulli_gate.1}
  #allocation0 [shape = 'u32[]', space=smem, size = 0x4, offset = 0x4, fixed_abs, tag = 'smem constant byte address 0x4 - core index']
  #allocation1 [shape = 'u32[72,128]{1,0:T(1,128)}', space=vmem, size = 0x9000, scoped, tag = 'internal scratch']
  #allocation2 [shape = 'f32[1]{0:T(128)S(6)}', space=smem, size = 0x200, scoped, tag = 'scoped memory for bernoulli_gate.1']
  %s0 = inlined_call_operand.vmem [shape: f32[200,128], index: 0, kind: input, shape index: {}]
  %s1 = inlined_call_operand.vmem [shape: f32[1,128], index: 1, kind: input, shape index: {}]
  %s2 = inlined_call_operand.<no memory space> [shape: f32[1], index: 2, kind: input, shape index: {}]
  %s3 = inlined_call_operand.vmem [shape: f32[1,200], index: 3, kind: output, shape index: {0}]
  %s4 = inlined_call_operand.vmem [shape: f32[1,200], index: 4, kind: output, shape index: {1}]
  %5 = xla_tuple %s3, %s4
  %s6 = sld [smem:[#allocation0]]
  $region53: #{bernoulli_gate.1} parent=0
    _
  %s8 = ssub.s32 1, %s6
  %s9 = scalar_select 0, %s8, %s6
  %10 = sst [smem:[#allocation2]] %s2
  loop: start=0, step=1, limit=4
  $region2: #{bernoulli_gate.1} parent=0 // loop_pre_header
    _
  $region3: #{bernoulli_gate.1} parent=0 // loop_header
    %s12 = sphi 0, %s16
    %p13 = scmp.ge.s32.totalorder %s12, 4
    %s22 = sphi 0, %s24
    %s25 = sphi 0, %s22
    %s26 = sphi 0, %s25
    %s42 = sphi 0, %s26
    %s46 = sphi 0, %s46
    %s48 = sphi 0, %s46
    %s49 = sphi 0, %s48
    %s63 = sphi 0, %s49
    %s67 = sphi 0, %s67
    %s69 = sphi 0, %s67
    %s70 = sphi 0, %s69
    %s84 = sphi 0, %s70
    %s90 = sphi 0, %s92
    %s93 = sphi 0, %s90
    %s94 = sphi 0, %s93
    %s110 = sphi 0, %s94
    %s116 = sphi 0, %s118
    %s119 = sphi 0, %s116
    %s120 = sphi 0, %s119
    %s136 = sphi 0, %s120
  $region4: #{bernoulli_gate.1} parent=0 // loop_header_branch
    %15 = sbr.rel (%p13) target = $region8
  $region5: #{bernoulli_gate.1} parent=0 // loop_body
    %s17 = ssub.s32 %s12, 1
    %s18 = ssub.s32 %s12, 2
    %s19 = sadd.s32 %s12, 1
    %s20 = ssub.s32 %s12, %s19
    %p21 = scmp.eq.s32.totalorder %s20, 0
    %s23 = sadd.s32 %s22, 1
    %s24 = scalar_select %p21, %s22, %s23
    %p27 = pneg %p21
    %p28 = scmp.eq.s32.totalorder %s12, 1
    %p29 = por %p27, %p28
    %p30 = scmp.ne.s32.totalorder %s22, %s25
    %p31 = scmp.eq.s32.totalorder %s12, 0
    %p32 = por %p30, %p31
    %p33 = scmp.ne.s32.totalorder %s22, %s25
    %p34 = scmp.eq.s32.totalorder %s17, 1
    %p35 = por %p33, %p34
    %p36 = scmp.ne.s32.totalorder %s25, %s26
    %p37 = scmp.eq.s32.totalorder %s17, 0
    %p38 = por %p36, %p37
    %p39 = scmp.ne.s32.totalorder %s25, %s26
    %p40 = scmp.eq.s32.totalorder %s18, 1
    %p41 = por %p39, %p40
    %p43 = scmp.ne.s32.totalorder %s26, %s42
    %p44 = scmp.eq.s32.totalorder %s18, 0
    %p45 = por %p43, %p44
    %s47 = sadd.s32 %s46, 1
    %p50 = scmp.eq.s32.totalorder %s12, 1
    %p51 = scmp.ne.s32.totalorder %s46, %s48
    %p52 = scmp.eq.s32.totalorder %s12, 0
    %p53 = por %p51, %p52
    %p54 = scmp.ne.s32.totalorder %s46, %s48
    %p55 = scmp.eq.s32.totalorder %s17, 1
    %p56 = por %p54, %p55
    %p57 = scmp.ne.s32.totalorder %s48, %s49
    %p58 = scmp.eq.s32.totalorder %s17, 0
    %p59 = por %p57, %p58
    %p60 = scmp.ne.s32.totalorder %s48, %s49
    %p61 = scmp.eq.s32.totalorder %s18, 1
    %p62 = por %p60, %p61
    %p64 = scmp.ne.s32.totalorder %s49, %s63
    %p65 = scmp.eq.s32.totalorder %s18, 0
    %p66 = por %p64, %p65
    %s68 = sadd.s32 %s67, 1
    %p71 = scmp.eq.s32.totalorder %s12, 1
    %p72 = scmp.ne.s32.totalorder %s67, %s69
    %p73 = scmp.eq.s32.totalorder %s12, 0
    %p74 = por %p72, %p73
    %p75 = scmp.ne.s32.totalorder %s67, %s69
    %p76 = scmp.eq.s32.totalorder %s17, 1
    %p77 = por %p75, %p76
    %p78 = scmp.ne.s32.totalorder %s69, %s70
    %p79 = scmp.eq.s32.totalorder %s17, 0
    %p80 = por %p78, %p79
    %p81 = scmp.ne.s32.totalorder %s69, %s70
    %p82 = scmp.eq.s32.totalorder %s18, 1
    %p83 = por %p81, %p82
    %p85 = scmp.ne.s32.totalorder %s70, %s84
    %p86 = scmp.eq.s32.totalorder %s18, 0
    %p87 = por %p85, %p86
    %s88 = ssub.s32 %s12, %s19
    %p89 = scmp.eq.s32.totalorder %s88, 0
    %s91 = sadd.s32 %s90, 1
    %s92 = scalar_select %p89, %s90, %s91
    %p95 = pneg %p89
    %p96 = scmp.eq.s32.totalorder %s12, 1
    %p97 = por %p95, %p96
    %p98 = scmp.ne.s32.totalorder %s90, %s93
    %p99 = scmp.eq.s32.totalorder %s12, 0
    %p100 = por %p98, %p99
    %p101 = scmp.ne.s32.totalorder %s90, %s93
    %p102 = scmp.eq.s32.totalorder %s17, 1
    %p103 = por %p101, %p102
    %p104 = scmp.ne.s32.totalorder %s93, %s94
    %p105 = scmp.eq.s32.totalorder %s17, 0
    %p106 = por %p104, %p105
    %p107 = scmp.ne.s32.totalorder %s93, %s94
    %p108 = scmp.eq.s32.totalorder %s18, 1
    %p109 = por %p107, %p108
    %p111 = scmp.ne.s32.totalorder %s94, %s110
    %p112 = scmp.eq.s32.totalorder %s18, 0
    %p113 = por %p111, %p112
    %s114 = ssub.s32 %s12, %s19
    %p115 = scmp.eq.s32.totalorder %s114, 0
    %s117 = sadd.s32 %s116, 1
    %s118 = scalar_select %p115, %s116, %s117
    %p121 = pneg %p115
    %p122 = scmp.eq.s32.totalorder %s12, 1
    %p123 = por %p121, %p122
    %p124 = scmp.ne.s32.totalorder %s116, %s119
    %p125 = scmp.eq.s32.totalorder %s12, 0
    %p126 = por %p124, %p125
    %p127 = scmp.ne.s32.totalorder %s116, %s119
    %p128 = scmp.eq.s32.totalorder %s17, 1
    %p129 = por %p127, %p128
    %p130 = scmp.ne.s32.totalorder %s119, %s120
    %p131 = scmp.eq.s32.totalorder %s17, 0
    %p132 = por %p130, %p131
    %p133 = scmp.ne.s32.totalorder %s119, %s120
    %p134 = scmp.eq.s32.totalorder %s18, 1
    %p135 = por %p133, %p134
    %p137 = scmp.ne.s32.totalorder %s120, %s136
    %p138 = scmp.eq.s32.totalorder %s18, 0
    %p139 = por %p137, %p138
    %p140 = scmp.le.s32.totalorder 1, %s12
    %p141 = scmp.lt.s32.totalorder %s12, 3
    %p142 = pnand %p140, %p141
    %p143 = pneg %p142
    // Predicated region
    $region9: #{bernoulli_gate.1} parent=5 // pred_check
      _
    $region10: #{bernoulli_gate.1} parent=5 // pred_check_branch
      %145 = sbr.rel (%p142) target = $region12
    $region11: #{bernoulli_gate.1} parent=5 // pred_region
      %s146 = ssub.s32 %s12, 1
      // Predicated region
      $region13: #{bernoulli_gate.1} parent=11 // pred_check
        %p147 = pneg %p59
      $region14: #{bernoulli_gate.1} parent=11 // pred_check_branch
        %149 = sbr.rel (%p147) target = $region16
      $region15: #{bernoulli_gate.1} parent=11 // pred_region
        _
      $region16: #{bernoulli_gate.1} parent=11 // pred_fallthru
        _
      // Predicated region
      $region17: #{bernoulli_gate.1} parent=11 // pred_check
        %p150 = pneg %p80
      $region18: #{bernoulli_gate.1} parent=11 // pred_check_branch
        %152 = sbr.rel (%p150) target = $region20
      $region19: #{bernoulli_gate.1} parent=11 // pred_region
        _
      $region20: #{bernoulli_gate.1} parent=11 // pred_fallthru
        _
    $region12: #{bernoulli_gate.1} parent=5 // pred_fallthru
      _
    %p153 = scmp.lt.s32.totalorder %s12, 2
    // Predicated region
    $region21: #{bernoulli_gate.1} parent=5 // pred_check
      %p154 = pneg %p153
    $region22: #{bernoulli_gate.1} parent=5 // pred_check_branch
      %156 = sbr.rel (%p154) target = $region24
    $region23: #{bernoulli_gate.1} parent=5 // pred_region
      // Predicated region
      $region25: #{bernoulli_gate.1} parent=23 // pred_check
        %p157 = pneg %p32
      $region26: #{bernoulli_gate.1} parent=23 // pred_check_branch
        %159 = sbr.rel (%p157) target = $region28
      $region27: #{bernoulli_gate.1} parent=23 // pred_region
        %s160 = smul.u32 16, %s12
        %s161 = ssub.s32 25, %s160
        %p162 = scmp.lt.s32.totalorder %s161, 16
        %s163 = scalar_select %p162, %s161, 16
        %s164 = smul.u32 8, %s163
        %p165 = scmp.lt.s32.totalorder %s160, 24
        %s166 = scalar_select %p165, %s160, 24
        %s167 = smul.addr %s166, 8
        %s168 = scalar_lea.vmem %s0, %s167
        %s169 = smul.u32 16, %s12
        %s170 = ssub.s32 25, %s169
        %p171 = scmp.lt.s32.totalorder %s170, 16
        %s172 = scalar_select %p171, %s170, 16
        %s173 = smul.u32 8, %s172
      $region28: #{bernoulli_gate.1} parent=23 // pred_fallthru
        _
    $region24: #{bernoulli_gate.1} parent=5 // pred_fallthru
      _
    %p174 = scmp.le.s32.totalorder 1, %s12
    %p175 = scmp.lt.s32.totalorder %s12, 3
    %p176 = pnand %p174, %p175
    %p177 = pneg %p176
    // Predicated region
    $region29: #{bernoulli_gate.1} parent=5 // pred_check
      _
    $region30: #{bernoulli_gate.1} parent=5 // pred_check_branch
      %179 = sbr.rel (%p176) target = $region32
    $region31: #{bernoulli_gate.1} parent=5 // pred_region
      %s180 = ssub.s32 %s12, 1
      %s181 = smul.u32 16, %s17
      %s182 = ssub.s32 25, %s181
      %p183 = scmp.lt.s32.totalorder %s182, 16
      %s184 = scalar_select %p183, %s182, 16
      %s185 = smul.u32 8, %s184
      %p186 = scmp.lt.s32.totalorder %s181, 24
      %s187 = scalar_select %p186, %s181, 24
      %s188 = smul.addr %s187, 8
      %s189 = scalar_lea.vmem %s0, %s188
      %p190 = pneg %p38
      %p191 = pneg %p35
      %p192 = pneg %p59
      %p193 = pneg %p56
      %p194 = pneg %p80
      %p195 = pneg %p77
      %p196 = pneg %p106
      %p197 = pneg %p103
      %p198 = scmp.lt.s32.totalorder %s17, 1
      %s199 = scalar_select %p198, %s17, 1
      %s200 = scalar_lea.vmem %s3, %s199
      %p201 = pneg %p132
      %p202 = pneg %p129
      %p203 = scmp.lt.s32.totalorder %s17, 1
      %s204 = scalar_select %p203, %s17, 1
      %s205 = scalar_lea.vmem %s4, %s204
      %s206 = smul.u32 16, %s17
      %s207 = ssub.s32 25, %s206
      %p208 = scmp.lt.s32.totalorder %s207, 16
      %s209 = scalar_select %p208, %s207, 16
      %s210 = smul.u32 8, %s209
      %p211 = scmp.lt.s32.totalorder %s206, 24
      %s212 = scalar_select %p211, %s206, 24
      %s213 = smul.addr %s212, 8
      %s214 = scalar_lea.vmem %s0, %s213
      %s215 = smul.u32 16, %s17
      %s216 = ssub.s32 25, %s215
      %p217 = scmp.lt.s32.totalorder %s216, 16
      %s218 = scalar_select %p217, %s216, 16
      %s219 = smul.u32 8, %s218
      %p220 = scmp.lt.s32.totalorder %s17, 1
      %s221 = scalar_select %p220, %s17, 1
      %s222 = scalar_lea.vmem %s3, %s221
      %p223 = scmp.lt.s32.totalorder %s17, 1
      %s224 = scalar_select %p223, %s17, 1
      %s225 = scalar_lea.vmem %s4, %s224
      %v226 = vld [vmem:[%s1] sm:$0x1]
      %v227 = vld [vmem:[%s214] sm:$0xff]
      %v228 = vld [vmem:[%s214 + $0x8] sm:$0xff]
      %v229 = vld [vmem:[%s214 + $0x10] sm:$0xff]
      %v230 = vld [vmem:[%s214 + $0x18] sm:$0xff]
      %v231 = vld [vmem:[%s214 + $0x20] sm:$0xff]
      %v232 = vld [vmem:[%s214 + $0x28] sm:$0xff]
      %v233 = vld [vmem:[%s214 + $0x30] sm:$0xff]
      %v234 = vld [vmem:[%s214 + $0x38] sm:$0xff]
      %v235 = vld [vmem:[%s214 + $0x40] sm:$0xff]
      %v236 = vld [vmem:[%s214 + $0x48] sm:$0xff]
      %v237 = vld [vmem:[%s214 + $0x50] sm:$0xff]
      %v238 = vld [vmem:[%s214 + $0x58] sm:$0xff]
      %v239 = vld [vmem:[%s214 + $0x60] sm:$0xff]
      %v240 = vld [vmem:[%s214 + $0x68] sm:$0xff]
      %v241 = vld [vmem:[%s214 + $0x70] sm:$0xff]
      %v242 = vld [vmem:[%s214 + $0x78] sm:$0xff]
      %s243 = sld [smem:[#allocation2]]
      %v244 = vstv %s243
      %245 = vmatpush.xpose.msra.mxu0 %v242
      %246 = vmatpush.xpose.msra.mxu0 %v241
      %247 = vmatpush.xpose.msra.mxu0 %v240
      %248 = vmatpush.xpose.msra.mxu0 %v239
      %249 = vmatpush.xpose.msra.mxu0 %v238
      %250 = vmatpush.xpose.msra.mxu0 %v237
      %251 = vmatpush.xpose.msra.mxu0 %v236
      %252 = vmatpush.xpose.msra.mxu0 %v235
      %253 = vmatpush.xpose.msra.mxu0 %v234
      %254 = vmatpush.xpose.msra.mxu0 %v233
      %255 = vmatpush.xpose.msra.mxu0 %v232
      %256 = vmatpush.xpose.msra.mxu0 %v231
      %257 = vmatpush.xpose.msra.mxu0 %v230
      %258 = vmatpush.xpose.msra.mxu0 %v229
      %259 = vmatpush.xpose.msra.mxu0 %v228
      %260 = vmatpush.xpose.msra.mxu0 %v227
      %261 = vmatmul.f32.gmra.mxu0 %v226
      %v262 = vpop.f32.mrf.mxu0
      %v263 = vadd.f32 %v244, %v262
      %264 = vdwg.mxu0
      %265 = vst [vmem:[%s222] sm:$0x1] %v263
      %v266 = vxor.u32 %v263, 2147483648
      %v267 = vmul.f32 %v266, 1.442695
      %v268 = vpow.pop %v267
      %v269 = vadd.f32 %v268, 1.0
      %v270 = vrcp.pop %v269
      %v271 = vmul.f32 %v269, %v270
      %v272 = vsub.f32 1.0, %v271
      %v273 = vmul.f32 %v270, %v272
      %v274 = vadd.f32 %v270, %v273
      %vm275 = vweird.f32 %v269
      %vm276 = vweird.f32 %v270
      %vm277 = vmor %vm275, %vm276
      %v278 = vsel %vm277, %v270, %v274
      %v279 = vand.u32 2147483647, %v269
      %vm280 = vcmp.eq.f32.partialorder %v279, 8.507059e+37
      %v281 = vand.u32 %v269, 2147483648
      %v282 = vor.u32 1.1754944e-38, %v281
      %v283 = vsel %vm280, %v282, %v278
      %v284 = vmul.f32 1.0, %v283
      %285 = vst [vmem:[%s225] sm:$0x1] %v284
      %p286 = scmp.lt.s32.totalorder %s17, 1
      %s287 = scalar_select %p286, %s17, 1
      %s288 = scalar_lea.vmem %s3, %s287
      %p289 = scmp.lt.s32.totalorder %s17, 1
      %s290 = scalar_select %p289, %s17, 1
      %s291 = scalar_lea.vmem %s4, %s290
      // Predicated region
      $region33: #{bernoulli_gate.1} parent=31 // pred_check
        %p292 = pneg %p103
      $region34: #{bernoulli_gate.1} parent=31 // pred_check_branch
        %294 = sbr.rel (%p292) target = $region36
      $region35: #{bernoulli_gate.1} parent=31 // pred_region
        _
      $region36: #{bernoulli_gate.1} parent=31 // pred_fallthru
        _
      // Predicated region
      $region37: #{bernoulli_gate.1} parent=31 // pred_check
        %p295 = pneg %p129
      $region38: #{bernoulli_gate.1} parent=31 // pred_check_branch
        %297 = sbr.rel (%p295) target = $region40
      $region39: #{bernoulli_gate.1} parent=31 // pred_region
        _
      $region40: #{bernoulli_gate.1} parent=31 // pred_fallthru
        _
    $region32: #{bernoulli_gate.1} parent=5 // pred_fallthru
      _
    %p298 = scmp.le.s32.totalorder 2, %s12
    // Predicated region
    $region41: #{bernoulli_gate.1} parent=5 // pred_check
      %p299 = pneg %p298
    $region42: #{bernoulli_gate.1} parent=5 // pred_check_branch
      %301 = sbr.rel (%p299) target = $region44
    $region43: #{bernoulli_gate.1} parent=5 // pred_region
      %s302 = ssub.s32 %s12, 2
      // Predicated region
      $region45: #{bernoulli_gate.1} parent=43 // pred_check
        %p303 = pneg %p109
      $region46: #{bernoulli_gate.1} parent=43 // pred_check_branch
        %305 = sbr.rel (%p303) target = $region48
      $region47: #{bernoulli_gate.1} parent=43 // pred_region
        %p306 = scmp.lt.s32.totalorder %s18, 1
        %s307 = scalar_select %p306, %s18, 1
        %s308 = scalar_lea.vmem %s3, %s307
      $region48: #{bernoulli_gate.1} parent=43 // pred_fallthru
        _
      // Predicated region
      $region49: #{bernoulli_gate.1} parent=43 // pred_check
        %p309 = pneg %p135
      $region50: #{bernoulli_gate.1} parent=43 // pred_check_branch
        %311 = sbr.rel (%p309) target = $region52
      $region51: #{bernoulli_gate.1} parent=43 // pred_region
        %p312 = scmp.lt.s32.totalorder %s18, 1
        %s313 = scalar_select %p312, %s18, 1
        %s314 = scalar_lea.vmem %s4, %s313
      $region52: #{bernoulli_gate.1} parent=43 // pred_fallthru
        _
    $region44: #{bernoulli_gate.1} parent=5 // pred_fallthru
      _
  $region6: #{bernoulli_gate.1} parent=0 // loop_footer
    %s16 = sadd.s32 1, %s12
  $region7: #{bernoulli_gate.1} parent=0 // loop_footer_branch
    %11 = sbr.rel target = $region3
  $region8: #{bernoulli_gate.1} parent=0 // loop_exit
    _

</llo_original>
